<compile_context>
chip_gen: v6e
topology: v6e:2x2x1
jax: 0.10.0
libtpu: 0.0.40
codegen_flags: <defaults>
</compile_context>

<pallas_src>
from functools import partial

import jax
import jax.numpy as jnp
from jax.experimental import pallas as pl
from jax.experimental.pallas import tpu as pltpu


def _round_up(x, m):
    return ((x + m - 1) // m) * m


# ----------------------------------------------------------------------------
# Pallas kernel: fused multi-layer single-step LSTM + final Linear on one
# batch tile.  refs = (x_ref, [w_l, b_l] * num_layers, w_fc, b_fc, out_ref)
#   w_l : (in_dim_l, G)   pre-transposed input weights (G = 3H or 4H)
#   b_l : (1, G)          combined bias b_ih + b_hh (same gate layout)
#   w_fc: (H, Hp)         pre-transposed fc weight, zero-padded to lane width
#   b_fc: (1, Hp)
# ----------------------------------------------------------------------------
def _encoder_kernel(num_layers, hidden_dim, drop_forget, *refs):
    x_ref, *param_refs, out_ref = refs
    H = hidden_dim

    h = x_ref[...]                                   # (TB, in_dim)
    for layer in range(num_layers):
        w = param_refs[2 * layer][...]               # (in_dim_l, G)
        b = param_refs[2 * layer + 1][...]           # (1, G)
        gates = jnp.dot(h, w, preferred_element_type=jnp.float32) + b
        if drop_forget:
            # packed gate order: [i, g, o] (forget column dropped at init time)
            i_g = jax.nn.sigmoid(gates[:, 0 * H:1 * H])
            g_g = jnp.tanh(gates[:, 1 * H:2 * H])
            o_g = jax.nn.sigmoid(gates[:, 2 * H:3 * H])
        else:
            # PyTorch gate order: [i, f, g, o]; forget gate multiplies c0 == 0.
            i_g = jax.nn.sigmoid(gates[:, 0 * H:1 * H])
            g_g = jnp.tanh(gates[:, 2 * H:3 * H])
            o_g = jax.nn.sigmoid(gates[:, 3 * H:4 * H])
        c = i_g * g_g                                # c = f*c0 + i*g with c0 == 0
        h = o_g * jnp.tanh(c)                        # new hidden state

    w_fc = param_refs[-2][...]                       # (H, Hp)
    b_fc = param_refs[-1][...]                       # (1, Hp)
    out_ref[...] = jnp.dot(h, w_fc, preferred_element_type=jnp.float32) + b_fc


# ----------------------------------------------------------------------------
# Parameter init (deterministic, PyTorch-style uniform(-1/sqrt(H), 1/sqrt(H)))
# plus kernel-ready (pre-transposed / combined / padded) weight stack.
# ----------------------------------------------------------------------------
def init_params(key, input_dim, hidden_dim, num_layers, num_classes):
    H = hidden_dim
    bound = 1.0 / float(H) ** 0.5
    keys = jax.random.split(key, 4 * num_layers + 4)
    ki = 0

    def u(shape, b):
        nonlocal ki
        out = jax.random.uniform(keys[ki], shape, jnp.float32, -b, b)
        ki += 1
        return out

    lstm = []
    for layer in range(num_layers):
        in_dim = input_dim if layer == 0 else H
        w_ih = u((4 * H, in_dim), bound)
        w_hh = u((4 * H, H), bound)      # unused in forward (h0 == 0), kept for fidelity
        b_ih = u((4 * H,), bound)
        b_hh = u((4 * H,), bound)
        lstm.append((w_ih, w_hh, b_ih, b_hh))

    w_fc = u((H, H), bound)
    b_fc = u((H,), bound)
    # classifier params (used only by .classify(), not by forward()) — fresh keys.
    w_cls = u((num_classes, H), bound)
    b_cls = u((num_classes,), bound)

    # ---- kernel-ready weights (computed once, never per call) ----
    drop_forget = (3 * H) % 128 == 0      # only worth it when 3H stays lane-aligned
    out_pad = _round_up(H, 128)           # lane-dense fc output width

    kernel_args = []
    for (w_ih_l, _w_hh_l, b_ih_l, b_hh_l) in lstm:
        w_t = jnp.transpose(w_ih_l)                         # (in_dim_l, 4H)
        b_t = (b_ih_l + b_hh_l).reshape(1, 4 * H)           # (1, 4H)
        if drop_forget:
            # keep [i, g, o]; f-gate columns only multiply c0 == 0.
            w_t = jnp.concatenate([w_t[:, :H], w_t[:, 2 * H:]], axis=1)
            b_t = jnp.concatenate([b_t[:, :H], b_t[:, 2 * H:]], axis=1)
        kernel_args.append(w_t)
        kernel_args.append(b_t)

    w_fc_p = jnp.zeros((H, out_pad), jnp.float32).at[:, :H].set(jnp.transpose(w_fc))
    b_fc_p = jnp.zeros((1, out_pad), jnp.float32).at[:, :H].set(b_fc)
    kernel_args += [w_fc_p, b_fc_p]

    return {
        "hidden_dim": H,
        "num_layers": num_layers,
        "drop_forget": drop_forget,
        "out_pad": out_pad,
        "lstm": lstm,
        "w_fc": w_fc,
        "b_fc": b_fc,
        "w_cls": w_cls,
        "b_cls": b_cls,
        "kernel_args": tuple(kernel_args),
    }


# ----------------------------------------------------------------------------
# pallas_call wrapper over a padded batch with a parallel grid over batch tiles.
# ----------------------------------------------------------------------------
def _encoder_pallas(x_padded, kernel_args, *, hidden_dim, num_layers,
                    drop_forget, out_pad, batch_tile):
    Bp, D = x_padded.shape
    grid = (Bp // batch_tile,)

    in_specs = [pl.BlockSpec((batch_tile, D), lambda i: (i, 0))]
    for a in kernel_args:
        # weights/biases: one full-array block, resident across all grid steps.
        in_specs.append(pl.BlockSpec(a.shape, lambda i: (0, 0)))
    out_spec = pl.BlockSpec((batch_tile, out_pad), lambda i: (i, 0))

    kernel = partial(_encoder_kernel, num_layers, hidden_dim, drop_forget)
    return pl.pallas_call(
        kernel,
        out_shape=jax.ShapeDtypeStruct((Bp, out_pad), jnp.float32),
        grid=grid,
        in_specs=in_specs,
        out_specs=out_spec,
        compiler_params=pltpu.CompilerParams(
            dimension_semantics=("parallel",)),
    )(x_padded, *kernel_args)


# ----------------------------------------------------------------------------
# Jitted forward builders.  Weight pre-processing already done at init; the
# x1/x2 pair is fused into one kernel launch.
# ----------------------------------------------------------------------------
def make_contrastive_forward(params):
    H = params["hidden_dim"]
    L = params["num_layers"]
    Hp = params["out_pad"]
    drop_f = params["drop_forget"]
    kargs = params["kernel_args"]

    def _run(x):                                     # x: (N, D) unpadded
        N = x.shape[0]
        TB = 128 if N >= 128 else _round_up(N, 8)    # sublane / MXU-row friendly tile
        Np = _round_up(N, TB)
        xp = jnp.pad(x, ((0, Np - N), (0, 0)))
        out = _encoder_pallas(xp, kargs, hidden_dim=H, num_layers=L,
                              drop_forget=drop_f, out_pad=Hp, batch_tile=TB)
        return out[:N, :H]

    @jax.jit
    def forward_pair(x1, x2):
        B = x1.shape[0]
        z = _run(jnp.concatenate([x1, x2], axis=0))  # one kernel for both encoders
        return z[:B], z[B:]

    @jax.jit
    def forward_single(x1):
        return _run(x1)

    return forward_pair, forward_single


# ----------------------------------------------------------------------------
# Pure-JAX reference (mirrors the PyTorch math) for a correctness check.
# ----------------------------------------------------------------------------
def encoder_ref(x, params):
    H = params["hidden_dim"]
    h = x
    for (w_ih, _w_hh, b_ih, b_hh) in params["lstm"]:
        gates = h @ w_ih.T + b_ih + b_hh
        i = jax.nn.sigmoid(gates[:, 0 * H:1 * H])
        g = jnp.tanh(gates[:, 2 * H:3 * H])
        o = jax.nn.sigmoid(gates[:, 3 * H:4 * H])
        c = i * g
        h = o * jnp.tanh(c)
    return h @ params["w_fc"].T + params["b_fc"]


if __name__ == "__main__":
    B, input_dim, hidden_dim, num_layers, num_classes = 2, 16, 32, 2, 4

    key = jax.random.PRNGKey(0)
    k_params, k_x1, k_x2 = jax.random.split(key, 3)

    params = init_params(k_params, input_dim, hidden_dim, num_layers, num_classes)
    x1 = jax.random.normal(k_x1, (B, input_dim), jnp.float32)
    x2 = jax.random.normal(k_x2, (B, input_dim), jnp.float32)

    forward_pair, forward_single = make_contrastive_forward(params)

    z1, z2 = forward_pair(x1, x2)
    z1 = jax.block_until_ready(z1)
    z2 = jax.block_until_ready(z2)

    z1_ref = encoder_ref(x1, params)
    z2_ref = encoder_ref(x2, params)

    assert z1.shape == (B, hidden_dim) and z2.shape == (B, hidden_dim)
    assert jnp.allclose(z1, z1_ref, rtol=1e-5, atol=1e-5), "z1 mismatch vs reference"
    assert jnp.allclose(z2, z2_ref, rtol=1e-5, atol=1e-5), "z2 mismatch vs reference"

    # single-input path (forward(x1) with x2=None)
    z_single = jax.block_until_ready(forward_single(x1))
    assert jnp.allclose(z_single, z1_ref, rtol=1e-5, atol=1e-5), "single-input mismatch"

    print("KERNEL_OK")
</pallas_src>

<mosaic_0001>
module attributes {stable_mosaic.version = 11 : i64} {
  func.func @_encoder_kernel(%arg0: i32, %arg1: memref<8x16xf32, #tpu.memory_space<vmem>>, %arg2: memref<16x128xf32, #tpu.memory_space<vmem>>, %arg3: memref<1x128xf32, #tpu.memory_space<vmem>>, %arg4: memref<32x128xf32, #tpu.memory_space<vmem>>, %arg5: memref<1x128xf32, #tpu.memory_space<vmem>>, %arg6: memref<32x128xf32, #tpu.memory_space<vmem>>, %arg7: memref<1x128xf32, #tpu.memory_space<vmem>>, %arg8: memref<8x128xf32, #tpu.memory_space<vmem>>) attributes {dimension_semantics = [#tpu.dimension_semantics<parallel>], iteration_bounds = array<i64: 1>, scalar_prefetch = 0 : i64, scratch_operands = 0 : i64, tpu.core_type = #tpu.core_type<tc>, window_params = [{transform_indices = @transform_0, window_bounds = array<i64: 8, 16>}, {pipeline_mode = #tpu.pipeline_mode<synchronous>, transform_indices = @transform_1, window_bounds = array<i64: 16, 128>}, {pipeline_mode = #tpu.pipeline_mode<synchronous>, transform_indices = @transform_2, window_bounds = array<i64: 1, 128>}, {pipeline_mode = #tpu.pipeline_mode<synchronous>, transform_indices = @transform_3, window_bounds = array<i64: 32, 128>}, {pipeline_mode = #tpu.pipeline_mode<synchronous>, transform_indices = @transform_4, window_bounds = array<i64: 1, 128>}, {pipeline_mode = #tpu.pipeline_mode<synchronous>, transform_indices = @transform_5, window_bounds = array<i64: 32, 128>}, {pipeline_mode = #tpu.pipeline_mode<synchronous>, transform_indices = @transform_6, window_bounds = array<i64: 1, 128>}, {transform_indices = @transform_7, window_bounds = array<i64: 8, 128>}]} {
    %c0 = arith.constant 0 : index
    %c0_0 = arith.constant 0 : index
    %0 = vector.load %arg1[%c0, %c0_0] : memref<8x16xf32, #tpu.memory_space<vmem>>, vector<8x16xf32>
    %c0_1 = arith.constant 0 : index
    %c0_2 = arith.constant 0 : index
    %1 = vector.load %arg2[%c0_1, %c0_2] : memref<16x128xf32, #tpu.memory_space<vmem>>, vector<16x128xf32>
    %c0_3 = arith.constant 0 : index
    %c0_4 = arith.constant 0 : index
    %2 = vector.load %arg3[%c0_3, %c0_4] : memref<1x128xf32, #tpu.memory_space<vmem>>, vector<1x128xf32>
    %cst = arith.constant dense<0.000000e+00> : vector<8x128xf32>
    %3 = tpu.matmul %0, %1, %cst {dimension_numbers = #tpu.dot_dimension_numbers<[1], [0], [0], [1], [0, 0, 1, 1], [], []>} : vector<8x16xf32>, vector<16x128xf32>, vector<8x128xf32> -> vector<8x128xf32>
    %4 = vector.broadcast %2 : vector<1x128xf32> to vector<8x128xf32>
    %5 = arith.addf %3, %4 : vector<8x128xf32>
    %6 = vector.extract_strided_slice %5 {offsets = [0, 0], sizes = [8, 32], strides = [1, 1]} : vector<8x128xf32> to vector<8x32xf32>
    %7 = arith.negf %6 : vector<8x32xf32>
    %8 = math.exp %7 : vector<8x32xf32>
    %cst_5 = arith.constant 1.000000e+00 : f32
    %9 = vector.broadcast %cst_5 : f32 to vector<8x32xf32>
    %10 = arith.addf %9, %8 : vector<8x32xf32>
    %11 = arith.divf %9, %10 : vector<8x32xf32>
    %12 = vector.extract_strided_slice %5 {offsets = [0, 64], sizes = [8, 32], strides = [1, 1]} : vector<8x128xf32> to vector<8x32xf32>
    %13 = math.tanh %12 : vector<8x32xf32>
    %14 = vector.extract_strided_slice %5 {offsets = [0, 96], sizes = [8, 32], strides = [1, 1]} : vector<8x128xf32> to vector<8x32xf32>
    %15 = arith.negf %14 : vector<8x32xf32>
    %16 = math.exp %15 : vector<8x32xf32>
    %cst_6 = arith.constant 1.000000e+00 : f32
    %17 = vector.broadcast %cst_6 : f32 to vector<8x32xf32>
    %18 = arith.addf %17, %16 : vector<8x32xf32>
    %19 = arith.divf %17, %18 : vector<8x32xf32>
    %20 = arith.mulf %11, %13 : vector<8x32xf32>
    %21 = math.tanh %20 : vector<8x32xf32>
    %22 = arith.mulf %19, %21 : vector<8x32xf32>
    %c0_7 = arith.constant 0 : index
    %c0_8 = arith.constant 0 : index
    %23 = vector.load %arg4[%c0_7, %c0_8] : memref<32x128xf32, #tpu.memory_space<vmem>>, vector<32x128xf32>
    %c0_9 = arith.constant 0 : index
    %c0_10 = arith.constant 0 : index
    %24 = vector.load %arg5[%c0_9, %c0_10] : memref<1x128xf32, #tpu.memory_space<vmem>>, vector<1x128xf32>
    %cst_11 = arith.constant dense<0.000000e+00> : vector<8x128xf32>
    %25 = tpu.matmul %22, %23, %cst_11 {dimension_numbers = #tpu.dot_dimension_numbers<[1], [0], [0], [1], [0, 0, 1, 1], [], []>} : vector<8x32xf32>, vector<32x128xf32>, vector<8x128xf32> -> vector<8x128xf32>
    %26 = vector.broadcast %24 : vector<1x128xf32> to vector<8x128xf32>
    %27 = arith.addf %25, %26 : vector<8x128xf32>
    %28 = vector.extract_strided_slice %27 {offsets = [0, 0], sizes = [8, 32], strides = [1, 1]} : vector<8x128xf32> to vector<8x32xf32>
    %29 = arith.negf %28 : vector<8x32xf32>
    %30 = math.exp %29 : vector<8x32xf32>
    %cst_12 = arith.constant 1.000000e+00 : f32
    %31 = vector.broadcast %cst_12 : f32 to vector<8x32xf32>
    %32 = arith.addf %31, %30 : vector<8x32xf32>
    %33 = arith.divf %31, %32 : vector<8x32xf32>
    %34 = vector.extract_strided_slice %27 {offsets = [0, 64], sizes = [8, 32], strides = [1, 1]} : vector<8x128xf32> to vector<8x32xf32>
    %35 = math.tanh %34 : vector<8x32xf32>
    %36 = vector.extract_strided_slice %27 {offsets = [0, 96], sizes = [8, 32], strides = [1, 1]} : vector<8x128xf32> to vector<8x32xf32>
    %37 = arith.negf %36 : vector<8x32xf32>
    %38 = math.exp %37 : vector<8x32xf32>
    %cst_13 = arith.constant 1.000000e+00 : f32
    %39 = vector.broadcast %cst_13 : f32 to vector<8x32xf32>
    %40 = arith.addf %39, %38 : vector<8x32xf32>
    %41 = arith.divf %39, %40 : vector<8x32xf32>
    %42 = arith.mulf %33, %35 : vector<8x32xf32>
    %43 = math.tanh %42 : vector<8x32xf32>
    %44 = arith.mulf %41, %43 : vector<8x32xf32>
    %c0_14 = arith.constant 0 : index
    %c0_15 = arith.constant 0 : index
    %45 = vector.load %arg6[%c0_14, %c0_15] : memref<32x128xf32, #tpu.memory_space<vmem>>, vector<32x128xf32>
    %c0_16 = arith.constant 0 : index
    %c0_17 = arith.constant 0 : index
    %46 = vector.load %arg7[%c0_16, %c0_17] : memref<1x128xf32, #tpu.memory_space<vmem>>, vector<1x128xf32>
    %cst_18 = arith.constant dense<0.000000e+00> : vector<8x128xf32>
    %47 = tpu.matmul %44, %45, %cst_18 {dimension_numbers = #tpu.dot_dimension_numbers<[1], [0], [0], [1], [0, 0, 1, 1], [], []>} : vector<8x32xf32>, vector<32x128xf32>, vector<8x128xf32> -> vector<8x128xf32>
    %48 = vector.broadcast %46 : vector<1x128xf32> to vector<8x128xf32>
    %49 = arith.addf %47, %48 : vector<8x128xf32>
    %c0_19 = arith.constant 0 : index
    %c0_20 = arith.constant 0 : index
    %50 = vector.load %arg8[%c0_19, %c0_20] : memref<8x128xf32, #tpu.memory_space<vmem>>, vector<8x128xf32>
    tpu.vector_store %arg8[%c0_19, %c0_20], %49 {strides = array<i32>} : memref<8x128xf32, #tpu.memory_space<vmem>>, vector<8x128xf32>,
    return
  }
  func.func @transform_0(%arg0: i32) -> (i32, i32) {
    %c0_i32 = arith.constant 0 : i32
    %c0_i32_0 = arith.constant 0 : i32
    return %arg0, %c0_i32 : i32, i32
  }
  func.func @transform_1(%arg0: i32) -> (i32, i32) {
    %c0_i32 = arith.constant 0 : i32
    %c0_i32_0 = arith.constant 0 : i32
    %c0_i32_1 = arith.constant 0 : i32
    return %c0_i32, %c0_i32_0 : i32, i32
  }
  func.func @transform_2(%arg0: i32) -> (i32, i32) {
    %c0_i32 = arith.constant 0 : i32
    %c0_i32_0 = arith.constant 0 : i32
    %c0_i32_1 = arith.constant 0 : i32
    return %c0_i32, %c0_i32_0 : i32, i32
  }
  func.func @transform_3(%arg0: i32) -> (i32, i32) {
    %c0_i32 = arith.constant 0 : i32
    %c0_i32_0 = arith.constant 0 : i32
    %c0_i32_1 = arith.constant 0 : i32
    return %c0_i32, %c0_i32_0 : i32, i32
  }
  func.func @transform_4(%arg0: i32) -> (i32, i32) {
    %c0_i32 = arith.constant 0 : i32
    %c0_i32_0 = arith.constant 0 : i32
    %c0_i32_1 = arith.constant 0 : i32
    return %c0_i32, %c0_i32_0 : i32, i32
  }
  func.func @transform_5(%arg0: i32) -> (i32, i32) {
    %c0_i32 = arith.constant 0 : i32
    %c0_i32_0 = arith.constant 0 : i32
    %c0_i32_1 = arith.constant 0 : i32
    return %c0_i32, %c0_i32_0 : i32, i32
  }
  func.func @transform_6(%arg0: i32) -> (i32, i32) {
    %c0_i32 = arith.constant 0 : i32
    %c0_i32_0 = arith.constant 0 : i32
    %c0_i32_1 = arith.constant 0 : i32
    return %c0_i32, %c0_i32_0 : i32, i32
  }
  func.func @transform_7(%arg0: i32) -> (i32, i32) {
    %c0_i32 = arith.constant 0 : i32
    %c0_i32_0 = arith.constant 0 : i32
    return %arg0, %c0_i32 : i32, i32
  }
}

</mosaic_0001>

<llo_original>
// kernel: forward_pair.1
$region0: #{forward_pair.1}
  #allocation0 [shape = 'u32[]', space=smem, size = 0x4, offset = 0x4, fixed_abs, tag = 'smem constant byte address 0x4 - core index']
  #allocation1 [shape = 'u32[144,128]{1,0:T(1,128)}', space=vmem, size = 0x12000, scoped, tag = 'internal scratch']
  %s0 = inlined_call_operand.vmem [shape: f32[8,16], index: 0, kind: input, shape index: {}]
  %s1 = inlined_call_operand.hbm [shape: f32[16,128], index: 1, kind: input, shape index: {}]
  %s2 = inlined_call_operand.vmem [shape: f32[1,128], index: 2, kind: input, shape index: {}]
  %s3 = inlined_call_operand.hbm [shape: f32[32,128], index: 3, kind: input, shape index: {}]
  %s4 = inlined_call_operand.vmem [shape: f32[1,128], index: 4, kind: input, shape index: {}]
  %s5 = inlined_call_operand.hbm [shape: f32[32,128], index: 5, kind: input, shape index: {}]
  %s6 = inlined_call_operand.vmem [shape: f32[1,128], index: 6, kind: input, shape index: {}]
  %s7 = inlined_call_operand.vmem [shape: f32[8,128], index: 7, kind: output, shape index: {}]
  %s8 = sld [smem:[#allocation0]]
  $region50: #{forward_pair.1} parent=0
    _
  %s10 = ssub.s32 1, %s8
  %s11 = scalar_select 0, %s10, %s8
  $region1: #{forward_pair.1} parent=0
    #allocation2 [shape = 'u8[8192]{0}', space=vmem, size = 0x2000, scoped, tag = 'input window, operand 1, single buffered']
    #allocation3 [shape = 's32[1]{0}', space=sflag, size = 0x4, scoped, tag = 'scoped memory for forward_pair.1']
    #allocation4 [shape = 'u8[16384]{0}', space=vmem, size = 0x4000, scoped, tag = 'input window, operand 3, single buffered']
    #allocation5 [shape = 's32[1]{0}', space=sflag, size = 0x4, scoped, tag = 'scoped memory for forward_pair.1']
    #allocation6 [shape = 'u8[16384]{0}', space=vmem, size = 0x4000, scoped, tag = 'input window, operand 5, single buffered']
    %12 = vsyncpa [#allocation3], 0
    %13 = vsyncpa [#allocation5], 0
    // Predicated region
    $region2: #{forward_pair.1} parent=1 // pred_check
      _
    $region3: #{forward_pair.1} parent=1 // pred_check_branch
      %15 = sbr.rel (0) target = $region5
    $region4: #{forward_pair.1} parent=1 // pred_region
      _
    $region5: #{forward_pair.1} parent=1 // pred_fallthru
      _
    // Predicated region
    $region6: #{forward_pair.1} parent=1 // pred_check
      _
    $region7: #{forward_pair.1} parent=1 // pred_check_branch
      %17 = sbr.rel (0) target = $region9
    $region8: #{forward_pair.1} parent=1 // pred_region
      %s19 = ssub.s32 256, 256
      %20 = vsyncadd [#allocation3], %s19
      %s21 = sshll.u32 [#allocation2], 4
      %s22 = int_to_ptr.vmem [resolvable:$true] %s21
      %27 = dma.hbm_to_vmem [thread:$0]  %s1, 256, %s22, [#allocation3], 128, 128, 8
    $region9: #{forward_pair.1} parent=1 // pred_fallthru
      _
    // Predicated region
    $region10: #{forward_pair.1} parent=1 // pred_check
      _
    $region11: #{forward_pair.1} parent=1 // pred_check_branch
      %29 = sbr.rel (0) target = $region13
    $region12: #{forward_pair.1} parent=1 // pred_region
      _
    $region13: #{forward_pair.1} parent=1 // pred_fallthru
      _
    // Predicated region
    $region14: #{forward_pair.1} parent=1 // pred_check
      _
    $region15: #{forward_pair.1} parent=1 // pred_check_branch
      %31 = sbr.rel (0) target = $region17
    $region16: #{forward_pair.1} parent=1 // pred_region
      %s33 = ssub.s32 512, 512
      %34 = vsyncadd [#allocation5], %s33
      %s35 = sshll.u32 [#allocation4], 4
      %s36 = int_to_ptr.vmem [resolvable:$true] %s35
      %41 = dma.hbm_to_vmem [thread:$0]  %s3, 512, %s36, [#allocation5], 128, 128, 8
    $region17: #{forward_pair.1} parent=1 // pred_fallthru
      _
    // Predicated region
    $region18: #{forward_pair.1} parent=1 // pred_check
      _
    $region19: #{forward_pair.1} parent=1 // pred_check_branch
      %43 = sbr.rel (0) target = $region21
    $region20: #{forward_pair.1} parent=1 // pred_region
      _
    $region21: #{forward_pair.1} parent=1 // pred_fallthru
      _
    // Predicated region
    $region22: #{forward_pair.1} parent=1 // pred_check
      _
    $region23: #{forward_pair.1} parent=1 // pred_check_branch
      %45 = sbr.rel (0) target = $region25
    $region24: #{forward_pair.1} parent=1 // pred_region
      %s47 = ssub.s32 512, 512
      %48 = vsyncadd [#allocation5], %s47
      %s49 = sshll.u32 [#allocation6], 4
      %s50 = int_to_ptr.vmem [resolvable:$true] %s49
      %55 = dma.hbm_to_vmem [thread:$0]  %s5, 512, %s50, [#allocation5], 128, 128, 8
    $region25: #{forward_pair.1} parent=1 // pred_fallthru
      _
    // Predicated region
    $region26: #{forward_pair.1} parent=1 // pred_check
      _
    $region27: #{forward_pair.1} parent=1 // pred_check_branch
      %57 = sbr.rel (0) target = $region29
    $region28: #{forward_pair.1} parent=1 // pred_region
      _
    $region29: #{forward_pair.1} parent=1 // pred_fallthru
      _
    // Predicated region
    $region30: #{forward_pair.1} parent=1 // pred_check
      _
    $region31: #{forward_pair.1} parent=1 // pred_check_branch
      %59 = sbr.rel (0) target = $region33
    $region32: #{forward_pair.1} parent=1 // pred_region
      %60 = dma.done [#allocation3], 256
    $region33: #{forward_pair.1} parent=1 // pred_fallthru
      _
    // Predicated region
    $region34: #{forward_pair.1} parent=1 // pred_check
      _
    $region35: #{forward_pair.1} parent=1 // pred_check_branch
      %62 = sbr.rel (0) target = $region37
    $region36: #{forward_pair.1} parent=1 // pred_region
      %63 = dma.done [#allocation5], 512
    $region37: #{forward_pair.1} parent=1 // pred_fallthru
      _
    // Predicated region
    $region38: #{forward_pair.1} parent=1 // pred_check
      _
    $region39: #{forward_pair.1} parent=1 // pred_check_branch
      %65 = sbr.rel (0) target = $region41
    $region40: #{forward_pair.1} parent=1 // pred_region
      %66 = dma.done [#allocation5], 512
    $region41: #{forward_pair.1} parent=1 // pred_fallthru
      _
    %v67 = vld [vmem:[%s0] sm:$0xff]
    %v68 = vld [vmem:[#allocation2] sm:$0xff]
    %v69 = vld [vmem:[#allocation2 + $0x8] sm:$0xff]
    %v70 = vld [vmem:[%s2] sm:$0x1]
    %v72 = vlaneseq
    %v73 = vshrl.u32 %v72, 7
    %v74 = vsub.s32 0, %v73
    %v75 = vrot.slane %v70, %v74
    %vm77 = vcmask 130048
    %v79 = vsel %vm77, %v67, 0
    %81 = vmatprep.subr.mxu0 0.0
    %82 = vmatpush1.msra.mxu0 0.0
    %83 = vmatprep.subr.mxu0 0.0
    %84 = vmatpush1.msra.mxu0 0.0
    %85 = vmatprep.subr.mxu0 0.0
    %86 = vmatpush1.msra.mxu0 0.0
    %87 = vmatprep.subr.mxu0 0.0
    %88 = vmatpush1.msra.mxu0 0.0
    %89 = vmatprep.subr.mxu0 0.0
    %90 = vmatpush1.msra.mxu0 0.0
    %91 = vmatprep.subr.mxu0 0.0
    %92 = vmatpush1.msra.mxu0 0.0
    %93 = vmatprep.subr.mxu0 0.0
    %94 = vmatpush1.msra.mxu0 0.0
    %95 = vmatprep.subr.mxu0 0.0
    %96 = vmatpush1.msra.mxu0 0.0
    %97 = vmatprep.subr.mxu0 0.0
    %98 = vmatpush1.msra.mxu0 0.0
    %99 = vmatprep.subr.mxu0 0.0
    %100 = vmatpush1.msra.mxu0 0.0
    %101 = vmatprep.subr.mxu0 0.0
    %102 = vmatpush1.msra.mxu0 0.0
    %103 = vmatprep.subr.mxu0 0.0
    %104 = vmatpush1.msra.mxu0 0.0
    %105 = vmatprep.subr.mxu0 0.0
    %106 = vmatpush1.msra.mxu0 0.0
    %107 = vmatprep.subr.mxu0 0.0
    %108 = vmatpush1.msra.mxu0 0.0
    %109 = vmatprep.subr.mxu0 0.0
    %110 = vmatpush1.msra.mxu0 %v69
    %111 = vmatprep.subr.mxu0 0.0
    %112 = vmatpush1.msra.mxu0 %v68
    %113 = vmatprep.subr.mxu0 0.0
    %114 = vmatpush2.msra.mxu0 0.0
    %115 = vmatprep.subr.mxu0 0.0
    %116 = vmatpush2.msra.mxu0 0.0
    %117 = vmatprep.subr.mxu0 0.0
    %118 = vmatpush2.msra.mxu0 0.0
    %119 = vmatprep.subr.mxu0 0.0
    %120 = vmatpush2.msra.mxu0 0.0
    %121 = vmatprep.subr.mxu0 0.0
    %122 = vmatpush2.msra.mxu0 0.0
    %123 = vmatprep.subr.mxu0 0.0
    %124 = vmatpush2.msra.mxu0 0.0
    %125 = vmatprep.subr.mxu0 0.0
    %126 = vmatpush2.msra.mxu0 0.0
    %127 = vmatprep.subr.mxu0 0.0
    %128 = vmatpush2.msra.mxu0 0.0
    %129 = vmatprep.subr.mxu0 0.0
    %130 = vmatpush2.msra.mxu0 0.0
    %131 = vmatprep.subr.mxu0 0.0
    %132 = vmatpush2.msra.mxu0 0.0
    %133 = vmatprep.subr.mxu0 0.0
    %134 = vmatpush2.msra.mxu0 0.0
    %135 = vmatprep.subr.mxu0 0.0
    %136 = vmatpush2.msra.mxu0 0.0
    %137 = vmatprep.subr.mxu0 0.0
    %138 = vmatpush2.msra.mxu0 0.0
    %139 = vmatprep.subr.mxu0 0.0
    %140 = vmatpush2.msra.mxu0 0.0
    %141 = vmatprep.subr.mxu0 0.0
    %142 = vmatpush2.msra.mxu0 0.0
    %143 = vmatprep.subr.mxu0 0.0
    %144 = vmatpush2.msra.mxu0 0.0
    %145 = vmatprep.mubr.f32.mxu0 0.0
    %146 = vmatmul.mubr.f32.gmra.mxu0 %v79
    %v147 = vpop.f32.mrf.mxu0
    %v148 = vadd.f32 %v75, %v147
    %v149 = vpop.f32.mrf.mxu0
    %150 = vdwg.mxu0
    %v151 = vxor.u32 %v148, 2147483648
    %v152 = vmul.f32 %v151, 1.442695
    %v153 = vpow.pop %v152
    %v154 = vadd.f32 %v153, 1.0
    %v155 = vrcp.pop %v154
    %v156 = vmul.f32 1.0, %v155
    %v157 = vtanh.pop %v148
    %159 = vrot.lane.b32.xlu0 %v157, 64
    %v160 = vpop.permute.xlu0 %159
    %v162 = vmul.f32 %v156, %v160
    %v163 = vtanh.pop %v162
    %165 = vrot.lane.b32.xlu0 %v163, 96
    %v166 = vpop.permute.xlu0 %165
    %v168 = vmul.f32 %v156, %v166
    %v169 = vld [vmem:[#allocation4] sm:$0xff]
    %v170 = vld [vmem:[#allocation4 + $0x8] sm:$0xff]
    %v171 = vld [vmem:[#allocation4 + $0x10] sm:$0xff]
    %v172 = vld [vmem:[#allocation4 + $0x18] sm:$0xff]
    %v173 = vld [vmem:[%s4] sm:$0x1]
    %v175 = vlaneseq
    %v176 = vshrl.u32 %v175, 7
    %v177 = vsub.s32 0, %v176
    %v178 = vrot.slane %v173, %v177
    %181 = vrot.lane.b32.xlu0 %v168, 32
    %v182 = vpop.permute.xlu0 %181
    %vm183 = vcmask 261120
    %v184 = vsel %vm183, %v182, 0
    %186 = vmatprep.subr.mxu0 0.0
    %187 = vmatpush1.msra.mxu0 0.0
    %188 = vmatprep.subr.mxu0 0.0
    %189 = vmatpush1.msra.mxu0 0.0
    %190 = vmatprep.subr.mxu0 0.0
    %191 = vmatpush1.msra.mxu0 0.0
    %192 = vmatprep.subr.mxu0 0.0
    %193 = vmatpush1.msra.mxu0 0.0
    %194 = vmatprep.subr.mxu0 0.0
    %195 = vmatpush1.msra.mxu0 0.0
    %196 = vmatprep.subr.mxu0 0.0
    %197 = vmatpush1.msra.mxu0 0.0
    %198 = vmatprep.subr.mxu0 0.0
    %199 = vmatpush1.msra.mxu0 0.0
    %200 = vmatprep.subr.mxu0 0.0
    %201 = vmatpush1.msra.mxu0 0.0
    %202 = vmatprep.subr.mxu0 0.0
    %203 = vmatpush1.msra.mxu0 0.0
    %204 = vmatprep.subr.mxu0 0.0
    %205 = vmatpush1.msra.mxu0 0.0
    %206 = vmatprep.subr.mxu0 0.0
    %207 = vmatpush1.msra.mxu0 0.0
    %208 = vmatprep.subr.mxu0 0.0
    %209 = vmatpush1.msra.mxu0 0.0
    %210 = vmatprep.subr.mxu0 0.0
    %211 = vmatpush1.msra.mxu0 %v172
    %212 = vmatprep.subr.mxu0 0.0
    %213 = vmatpush1.msra.mxu0 %v171
    %214 = vmatprep.subr.mxu0 0.0
    %215 = vmatpush1.msra.mxu0 %v170
    %216 = vmatprep.subr.mxu0 0.0
    %217 = vmatpush1.msra.mxu0 %v169
    %218 = vmatprep.subr.mxu0 0.0
    %219 = vmatpush2.msra.mxu0 0.0
    %220 = vmatprep.subr.mxu0 0.0
    %221 = vmatpush2.msra.mxu0 0.0
    %222 = vmatprep.subr.mxu0 0.0
    %223 = vmatpush2.msra.mxu0 0.0
    %224 = vmatprep.subr.mxu0 0.0
    %225 = vmatpush2.msra.mxu0 0.0
    %226 = vmatprep.subr.mxu0 0.0
    %227 = vmatpush2.msra.mxu0 0.0
    %228 = vmatprep.subr.mxu0 0.0
    %229 = vmatpush2.msra.mxu0 0.0
    %230 = vmatprep.subr.mxu0 0.0
    %231 = vmatpush2.msra.mxu0 0.0
    %232 = vmatprep.subr.mxu0 0.0
    %233 = vmatpush2.msra.mxu0 0.0
    %234 = vmatprep.subr.mxu0 0.0
    %235 = vmatpush2.msra.mxu0 0.0
    %236 = vmatprep.subr.mxu0 0.0
    %237 = vmatpush2.msra.mxu0 0.0
    %238 = vmatprep.subr.mxu0 0.0
    %239 = vmatpush2.msra.mxu0 0.0
    %240 = vmatprep.subr.mxu0 0.0
    %241 = vmatpush2.msra.mxu0 0.0
    %242 = vmatprep.subr.mxu0 0.0
    %243 = vmatpush2.msra.mxu0 0.0
    %244 = vmatprep.subr.mxu0 0.0
    %245 = vmatpush2.msra.mxu0 0.0
    %246 = vmatprep.subr.mxu0 0.0
    %247 = vmatpush2.msra.mxu0 0.0
    %248 = vmatprep.subr.mxu0 0.0
    %249 = vmatpush2.msra.mxu0 0.0
    %250 = vmatprep.mubr.f32.mxu0 0.0
    %251 = vmatmul.mubr.f32.gmra.mxu0 %v184
    %v252 = vpop.f32.mrf.mxu0
    %v253 = vadd.f32 %v178, %v252
    %v254 = vpop.f32.mrf.mxu0
    %255 = vdwg.mxu0
    %v256 = vxor.u32 %v253, 2147483648
    %v257 = vmul.f32 %v256, 1.442695
    %v258 = vpow.pop %v257
    %v259 = vadd.f32 %v258, 1.0
    %v260 = vrcp.pop %v259
    %v261 = vmul.f32 1.0, %v260
    %v262 = vtanh.pop %v253
    %264 = vrot.lane.b32.xlu0 %v262, 64
    %v265 = vpop.permute.xlu0 %264
    %v267 = vmul.f32 %v261, %v265
    %v268 = vtanh.pop %v267
    %270 = vrot.lane.b32.xlu0 %v268, 96
    %v271 = vpop.permute.xlu0 %270
    %v273 = vmul.f32 %v261, %v271
    %v274 = vld [vmem:[#allocation6] sm:$0xff]
    %v275 = vld [vmem:[#allocation6 + $0x8] sm:$0xff]
    %v276 = vld [vmem:[#allocation6 + $0x10] sm:$0xff]
    %v277 = vld [vmem:[#allocation6 + $0x18] sm:$0xff]
    %v278 = vld [vmem:[%s6] sm:$0x1]
    %v280 = vlaneseq
    %v281 = vshrl.u32 %v280, 7
    %v282 = vsub.s32 0, %v281
    %v283 = vrot.slane %v278, %v282
    %286 = vrot.lane.b32.xlu0 %v273, 32
    %v287 = vpop.permute.xlu0 %286
    %v288 = vsel %vm183, %v287, 0
    %290 = vmatprep.subr.mxu0 0.0
    %291 = vmatpush1.msra.mxu0 0.0
    %292 = vmatprep.subr.mxu0 0.0
    %293 = vmatpush1.msra.mxu0 0.0
    %294 = vmatprep.subr.mxu0 0.0
    %295 = vmatpush1.msra.mxu0 0.0
    %296 = vmatprep.subr.mxu0 0.0
    %297 = vmatpush1.msra.mxu0 0.0
    %298 = vmatprep.subr.mxu0 0.0
    %299 = vmatpush1.msra.mxu0 0.0
    %300 = vmatprep.subr.mxu0 0.0
    %301 = vmatpush1.msra.mxu0 0.0
    %302 = vmatprep.subr.mxu0 0.0
    %303 = vmatpush1.msra.mxu0 0.0
    %304 = vmatprep.subr.mxu0 0.0
    %305 = vmatpush1.msra.mxu0 0.0
    %306 = vmatprep.subr.mxu0 0.0
    %307 = vmatpush1.msra.mxu0 0.0
    %308 = vmatprep.subr.mxu0 0.0
    %309 = vmatpush1.msra.mxu0 0.0
    %310 = vmatprep.subr.mxu0 0.0
    %311 = vmatpush1.msra.mxu0 0.0
    %312 = vmatprep.subr.mxu0 0.0
    %313 = vmatpush1.msra.mxu0 0.0
    %314 = vmatprep.subr.mxu0 0.0
    %315 = vmatpush1.msra.mxu0 %v277
    %316 = vmatprep.subr.mxu0 0.0
    %317 = vmatpush1.msra.mxu0 %v276
    %318 = vmatprep.subr.mxu0 0.0
    %319 = vmatpush1.msra.mxu0 %v275
    %320 = vmatprep.subr.mxu0 0.0
    %321 = vmatpush1.msra.mxu0 %v274
    %322 = vmatprep.subr.mxu0 0.0
    %323 = vmatpush2.msra.mxu0 0.0
    %324 = vmatprep.subr.mxu0 0.0
    %325 = vmatpush2.msra.mxu0 0.0
    %326 = vmatprep.subr.mxu0 0.0
    %327 = vmatpush2.msra.mxu0 0.0
    %328 = vmatprep.subr.mxu0 0.0
    %329 = vmatpush2.msra.mxu0 0.0
    %330 = vmatprep.subr.mxu0 0.0
    %331 = vmatpush2.msra.mxu0 0.0
    %332 = vmatprep.subr.mxu0 0.0
    %333 = vmatpush2.msra.mxu0 0.0
    %334 = vmatprep.subr.mxu0 0.0
    %335 = vmatpush2.msra.mxu0 0.0
    %336 = vmatprep.subr.mxu0 0.0
    %337 = vmatpush2.msra.mxu0 0.0
    %338 = vmatprep.subr.mxu0 0.0
    %339 = vmatpush2.msra.mxu0 0.0
    %340 = vmatprep.subr.mxu0 0.0
    %341 = vmatpush2.msra.mxu0 0.0
    %342 = vmatprep.subr.mxu0 0.0
    %343 = vmatpush2.msra.mxu0 0.0
    %344 = vmatprep.subr.mxu0 0.0
    %345 = vmatpush2.msra.mxu0 0.0
    %346 = vmatprep.subr.mxu0 0.0
    %347 = vmatpush2.msra.mxu0 0.0
    %348 = vmatprep.subr.mxu0 0.0
    %349 = vmatpush2.msra.mxu0 0.0
    %350 = vmatprep.subr.mxu0 0.0
    %351 = vmatpush2.msra.mxu0 0.0
    %352 = vmatprep.subr.mxu0 0.0
    %353 = vmatpush2.msra.mxu0 0.0
    %354 = vmatprep.mubr.f32.mxu0 0.0
    %355 = vmatmul.mubr.f32.gmra.mxu0 %v288
    %v356 = vpop.f32.mrf.mxu0
    %v357 = vadd.f32 %v283, %v356
    %v358 = vpop.f32.mrf.mxu0
    %359 = vdwg.mxu0
    %360 = vst [vmem:[%s7] sm:$0xff] %v357
    // Predicated region
    $region42: #{forward_pair.1} parent=1 // pred_check
      _
    $region43: #{forward_pair.1} parent=1 // pred_check_branch
      %362 = sbr.rel (0) target = $region45
    $region44: #{forward_pair.1} parent=1 // pred_region
      _
    $region45: #{forward_pair.1} parent=1 // pred_fallthru
      _
    // Predicated region
    $region46: #{forward_pair.1} parent=1 // pred_check
      _
    $region47: #{forward_pair.1} parent=1 // pred_check_branch
      %364 = sbr.rel (0) target = $region49
    $region48: #{forward_pair.1} parent=1 // pred_region
      _
    $region49: #{forward_pair.1} parent=1 // pred_fallthru
      _
    %365 = vsyncpa [#allocation3], 1
    %366 = vsyncpa [#allocation5], 1

</llo_original>
